<compile_context>
chip_gen: v5e
topology: v5e:2x2
jax: 0.10.0
libtpu: 0.0.40
codegen_flags: <defaults>
</compile_context>

<pallas_src>
import functools
import math

import jax
import jax.numpy as jnp
from jax import lax
from jax.experimental import pallas as pl
from jax.experimental.pallas import tpu as pltpu

SCALE_FACTOR = 1.0 + math.sin(2.39)
# TODO(synk): `dropout_p` is undefined in the original module (it cannot run as
# written); dropout is treated as p=0.0, i.e. the identity (eval mode).


def _flash_sdpa_kernel(q_ref, k_ref, v_ref, o_ref, m_sc, l_sc, acc_sc):
    kv = pl.program_id(2)

    @pl.when(kv == 0)
    def _init():
        m_sc[...] = jnp.full_like(m_sc, -jnp.inf)
        l_sc[...] = jnp.zeros_like(l_sc)
        acc_sc[...] = jnp.zeros_like(acc_sc)

    # Fold the scale into q (Lq x D elements instead of Lq x Lk scores); do it
    # in f32, then cast to bf16 so the MXU runs at native rate (f32 accum).
    q = (q_ref[...].astype(jnp.float32) * SCALE_FACTOR).astype(jnp.bfloat16)
    k = k_ref[...].astype(jnp.bfloat16)
    v = v_ref[...].astype(jnp.bfloat16)

    # q @ k^T without materializing the transpose: contract the last dim of
    # both operands (feeds the MXU directly, no XLU vxpose).
    s = lax.dot_general(
        q, k, (((1,), (1,)), ((), ())),
        preferred_element_type=jnp.float32)                 # (tq, tk) f32

    m_prev = m_sc[...]                                      # (tq, 1)
    m_new = jnp.maximum(m_prev, jnp.max(s, axis=-1, keepdims=True))
    alpha = jnp.exp(m_prev - m_new)                         # rescale old stats
    p = jnp.exp(s - m_new)                                  # unnormalized probs

    l_sc[...] = alpha * l_sc[...] + jnp.sum(p, axis=-1, keepdims=True)
    acc_sc[...] = alpha * acc_sc[...] + jnp.dot(
        p.astype(jnp.bfloat16), v, preferred_element_type=jnp.float32)
    m_sc[...] = m_new

    @pl.when(kv == pl.num_programs(2) - 1)
    def _finalize():
        # Normalize once over (tq, Dv) using the EUP approx reciprocal instead
        # of dividing the full (tq, Lk) probability matrix on the VALU.
        inv_l = pl.reciprocal(l_sc[...], approx=True)
        o_ref[...] = (acc_sc[...] * inv_l).astype(o_ref.dtype)


def _pick_tile(dim, cap, align=8):
    """Largest divisor of `dim` that is <= cap and a multiple of `align`."""
    if dim <= cap:
        return dim
    for t in range(cap, 0, -1):
        if dim % t == 0 and t % align == 0:
            return t
    return dim  # fall back to no tiling


@functools.partial(jax.jit, static_argnames=("tq_cap", "tk_cap"))
def sdpa(query, key, value, *, tq_cap=256, tk_cap=512):
    """query (B, Lq, D), key (B, Lk, D), value (B, Lk, Dv) -> (B, Lq, Dv)."""
    B, Lq, D = query.shape
    _, Lk, _ = key.shape
    _, _, Dv = value.shape
    assert key.shape == (B, Lk, D)
    assert value.shape == (B, Lk, Dv)

    tq = _pick_tile(Lq, tq_cap)
    tk = _pick_tile(Lk, tk_cap)
    grid = (B, Lq // tq, Lk // tk)

    cost = pl.CostEstimate(
        flops=2 * B * Lq * Lk * (D + Dv),
        transcendentals=B * Lq * Lk,
        bytes_accessed=(query.size + key.size + value.size + B * Lq * Dv)
        * query.dtype.itemsize,
    )

    grid_spec = pltpu.PrefetchScalarGridSpec(
        num_scalar_prefetch=0,
        grid=grid,
        in_specs=[
            pl.BlockSpec((pl.Squeezed(), tq, D), lambda b, qi, ki: (b, qi, 0)),
            pl.BlockSpec((pl.Squeezed(), tk, D), lambda b, qi, ki: (b, ki, 0)),
            pl.BlockSpec((pl.Squeezed(), tk, Dv), lambda b, qi, ki: (b, ki, 0)),
        ],
        out_specs=pl.BlockSpec(
            (pl.Squeezed(), tq, Dv), lambda b, qi, ki: (b, qi, 0)),
        scratch_shapes=[
            pltpu.VMEM((tq, 1), jnp.float32),    # running max m
            pltpu.VMEM((tq, 1), jnp.float32),    # running denom l
            pltpu.VMEM((tq, Dv), jnp.float32),   # f32 output accumulator
        ],
    )

    return pl.pallas_call(
        _flash_sdpa_kernel,
        out_shape=jax.ShapeDtypeStruct((B, Lq, Dv), query.dtype),
        grid_spec=grid_spec,
        compiler_params=pltpu.CompilerParams(
            dimension_semantics=("parallel", "parallel", "arbitrary")),
        cost_estimate=cost,
    )(query, key, value)


def sdpa_reference(query, key, value):
    # Pure f32 reference of the module semantics (dropout p=0 -> identity).
    qk = jnp.einsum("bqd,bkd->bqk", query, key) * SCALE_FACTOR
    p = jax.nn.softmax(qk, axis=-1)
    return jnp.einsum("bqk,bkv->bqv", p, value)


if __name__ == "__main__":
    # Small shapes consistent with the module's (B, Lq, D)x(B, Lk, D)x(B, Lk, Dv)
    # attention pattern; tq_cap/tk_cap are shrunk so the multi-tile online-
    # softmax path (2 q-tiles x 2 kv-tiles) is actually exercised.
    B, Lq, Lk, D, Dv = 2, 128, 256, 128, 128

    k0, k1, k2 = jax.random.split(jax.random.PRNGKey(0), 3)
    # Moderate magnitudes keep the (unscaled-by-1/sqrt(d)) softmax well
    # conditioned so the bf16-matmul vs f32-reference tolerance is meaningful.
    query = 0.25 * jax.random.normal(k0, (B, Lq, D), dtype=jnp.float32)
    key = 0.25 * jax.random.normal(k1, (B, Lk, D), dtype=jnp.float32)
    value = jax.random.normal(k2, (B, Lk, Dv), dtype=jnp.float32)

    out = jax.block_until_ready(sdpa(query, key, value, tq_cap=64, tk_cap=128))
    ref = jax.block_until_ready(sdpa_reference(query, key, value))

    assert out.shape == (B, Lq, Dv)
    assert not bool(jnp.any(jnp.isnan(out)))
    # bf16 MXU inputs (f32 accumulation) => relaxed tolerance vs f32 reference.
    assert jnp.allclose(out, ref, atol=2e-2, rtol=2e-2), (
        "mismatch vs reference, max abs err = "
        f"{float(jnp.max(jnp.abs(out - ref)))}")

    print("KERNEL_OK")
</pallas_src>

<mosaic_0001>
module attributes {stable_mosaic.version = 11 : i64} {
  func.func @_flash_sdpa_kernel(%arg0: i32, %arg1: i32, %arg2: i32, %arg3: memref<1x64x128xf32, #tpu.memory_space<vmem>>, %arg4: memref<1x128x128xf32, #tpu.memory_space<vmem>>, %arg5: memref<1x128x128xf32, #tpu.memory_space<vmem>>, %arg6: memref<1x64x128xf32, #tpu.memory_space<vmem>>, %arg7: memref<64x1xf32, #tpu.memory_space<vmem>>, %arg8: memref<64x1xf32, #tpu.memory_space<vmem>>, %arg9: memref<64x128xf32, #tpu.memory_space<vmem>>) attributes {dimension_semantics = [#tpu.dimension_semantics<parallel>, #tpu.dimension_semantics<parallel>, #tpu.dimension_semantics<arbitrary>], iteration_bounds = array<i64: 2, 2, 2>, scalar_prefetch = 0 : i64, scratch_operands = 3 : i64, tpu.core_type = #tpu.core_type<tc>, window_params = [{transform_indices = @transform_0, window_bounds = array<i64: 1, 64, 128>}, {transform_indices = @transform_1, window_bounds = array<i64: 1, 128, 128>}, {transform_indices = @transform_2, window_bounds = array<i64: 1, 128, 128>}, {transform_indices = @transform_3, window_bounds = array<i64: 1, 64, 128>}]} {
    %c0_i32 = arith.constant 0 : i32
    %0 = arith.cmpi eq, %arg2, %c0_i32 : i32
    %1 = arith.extui %0 : i1 to i32
    %c0_i32_0 = arith.constant 0 : i32
    %2 = arith.cmpi ne, %1, %c0_i32_0 : i32
    scf.if %2 {
      %cst_26 = arith.constant 0xFF800000 : f32
      %41 = vector.broadcast %cst_26 : f32 to vector<64x1xf32>
      %c0_27 = arith.constant 0 : index
      %c0_28 = arith.constant 0 : index
      %42 = vector.load %arg7[%c0_27, %c0_28] : memref<64x1xf32, #tpu.memory_space<vmem>>, vector<64x1xf32>
      tpu.vector_store %arg7[%c0_27, %c0_28], %41 {strides = array<i32>} : memref<64x1xf32, #tpu.memory_space<vmem>>, vector<64x1xf32>,
      %cst_29 = arith.constant 0.000000e+00 : f32
      %43 = vector.broadcast %cst_29 : f32 to vector<64x1xf32>
      %c0_30 = arith.constant 0 : index
      %c0_31 = arith.constant 0 : index
      %44 = vector.load %arg8[%c0_30, %c0_31] : memref<64x1xf32, #tpu.memory_space<vmem>>, vector<64x1xf32>
      tpu.vector_store %arg8[%c0_30, %c0_31], %43 {strides = array<i32>} : memref<64x1xf32, #tpu.memory_space<vmem>>, vector<64x1xf32>,
      %cst_32 = arith.constant 0.000000e+00 : f32
      %45 = vector.broadcast %cst_32 : f32 to vector<64x128xf32>
      %c0_33 = arith.constant 0 : index
      %c0_34 = arith.constant 0 : index
      %46 = vector.load %arg9[%c0_33, %c0_34] : memref<64x128xf32, #tpu.memory_space<vmem>>, vector<64x128xf32>
      tpu.vector_store %arg9[%c0_33, %c0_34], %45 {strides = array<i32>} : memref<64x128xf32, #tpu.memory_space<vmem>>, vector<64x128xf32>,
    } else {
    }
    %c0 = arith.constant 0 : index
    %c0_1 = arith.constant 0 : index
    %c0_2 = arith.constant 0 : index
    %3 = vector.load %arg3[%c0, %c0_1, %c0_2] : memref<1x64x128xf32, #tpu.memory_space<vmem>>, vector<1x64x128xf32>
    %4 = vector.shape_cast %3 : vector<1x64x128xf32> to vector<64x128xf32>
    %cst = arith.constant 1.68280327 : f32
    %5 = vector.broadcast %cst : f32 to vector<64x128xf32>
    %6 = arith.mulf %4, %5 : vector<64x128xf32>
    %7 = arith.truncf %6 : vector<64x128xf32> to vector<64x128xbf16>
    %c0_3 = arith.constant 0 : index
    %c0_4 = arith.constant 0 : index
    %c0_5 = arith.constant 0 : index
    %8 = vector.load %arg4[%c0_3, %c0_4, %c0_5] : memref<1x128x128xf32, #tpu.memory_space<vmem>>, vector<1x128x128xf32>
    %9 = vector.shape_cast %8 : vector<1x128x128xf32> to vector<128x128xf32>
    %10 = arith.truncf %9 : vector<128x128xf32> to vector<128x128xbf16>
    %c0_6 = arith.constant 0 : index
    %c0_7 = arith.constant 0 : index
    %c0_8 = arith.constant 0 : index
    %11 = vector.load %arg5[%c0_6, %c0_7, %c0_8] : memref<1x128x128xf32, #tpu.memory_space<vmem>>, vector<1x128x128xf32>
    %12 = vector.shape_cast %11 : vector<1x128x128xf32> to vector<128x128xf32>
    %13 = arith.truncf %12 : vector<128x128xf32> to vector<128x128xbf16>
    %cst_9 = arith.constant dense<0.000000e+00> : vector<64x128xf32>
    %14 = tpu.matmul %7, %10, %cst_9 {dimension_numbers = #tpu.dot_dimension_numbers<[1], [1], [0], [0], [0, 0, 1, 0], [], []>} : vector<64x128xbf16>, vector<128x128xbf16>, vector<64x128xf32> -> vector<64x128xf32>
    %c0_10 = arith.constant 0 : index
    %c0_11 = arith.constant 0 : index
    %15 = vector.load %arg7[%c0_10, %c0_11] : memref<64x1xf32, #tpu.memory_space<vmem>>, vector<64x1xf32>
    %cst_12 = arith.constant dense<0xFF800000> : vector<64xf32>
    %16 = vector.multi_reduction <maximumf>, %14, %cst_12 [1] : vector<64x128xf32> to vector<64xf32>
    %17 = vector.shape_cast %16 : vector<64xf32> to vector<64x1xf32>
    %18 = arith.maximumf %15, %17 : vector<64x1xf32>
    %19 = arith.subf %15, %18 : vector<64x1xf32>
    %20 = math.exp %19 : vector<64x1xf32>
    %21 = vector.broadcast %18 : vector<64x1xf32> to vector<64x128xf32>
    %22 = arith.subf %14, %21 : vector<64x128xf32>
    %23 = math.exp %22 : vector<64x128xf32>
    %c0_13 = arith.constant 0 : index
    %c0_14 = arith.constant 0 : index
    %24 = vector.load %arg8[%c0_13, %c0_14] : memref<64x1xf32, #tpu.memory_space<vmem>>, vector<64x1xf32>
    %25 = arith.mulf %20, %24 : vector<64x1xf32>
    %cst_15 = arith.constant dense<0.000000e+00> : vector<64xf32>
    %26 = vector.multi_reduction <add>, %23, %cst_15 [1] : vector<64x128xf32> to vector<64xf32>
    %27 = vector.shape_cast %26 : vector<64xf32> to vector<64x1xf32>
    %28 = arith.addf %25, %27 : vector<64x1xf32>
    %c0_16 = arith.constant 0 : index
    %c0_17 = arith.constant 0 : index
    %29 = vector.load %arg8[%c0_16, %c0_17] : memref<64x1xf32, #tpu.memory_space<vmem>>, vector<64x1xf32>
    tpu.vector_store %arg8[%c0_16, %c0_17], %28 {strides = array<i32>} : memref<64x1xf32, #tpu.memory_space<vmem>>, vector<64x1xf32>,
    %c0_18 = arith.constant 0 : index
    %c0_19 = arith.constant 0 : index
    %30 = vector.load %arg9[%c0_18, %c0_19] : memref<64x128xf32, #tpu.memory_space<vmem>>, vector<64x128xf32>
    %31 = vector.broadcast %20 : vector<64x1xf32> to vector<64x128xf32>
    %32 = arith.mulf %31, %30 : vector<64x128xf32>
    %33 = arith.truncf %23 : vector<64x128xf32> to vector<64x128xbf16>
    %cst_20 = arith.constant dense<0.000000e+00> : vector<64x128xf32>
    %34 = tpu.matmul %33, %13, %cst_20 {dimension_numbers = #tpu.dot_dimension_numbers<[1], [0], [0], [1], [0, 0, 1, 1], [], []>} : vector<64x128xbf16>, vector<128x128xbf16>, vector<64x128xf32> -> vector<64x128xf32>
    %35 = arith.addf %32, %34 : vector<64x128xf32>
    %c0_21 = arith.constant 0 : index
    %c0_22 = arith.constant 0 : index
    %36 = vector.load %arg9[%c0_21, %c0_22] : memref<64x128xf32, #tpu.memory_space<vmem>>, vector<64x128xf32>
    tpu.vector_store %arg9[%c0_21, %c0_22], %35 {strides = array<i32>} : memref<64x128xf32, #tpu.memory_space<vmem>>, vector<64x128xf32>,
    %c0_23 = arith.constant 0 : index
    %c0_24 = arith.constant 0 : index
    %37 = vector.load %arg7[%c0_23, %c0_24] : memref<64x1xf32, #tpu.memory_space<vmem>>, vector<64x1xf32>
    tpu.vector_store %arg7[%c0_23, %c0_24], %18 {strides = array<i32>} : memref<64x1xf32, #tpu.memory_space<vmem>>, vector<64x1xf32>,
    %c1_i32 = arith.constant 1 : i32
    %38 = arith.cmpi eq, %arg2, %c1_i32 : i32
    %39 = arith.extui %38 : i1 to i32
    %c0_i32_25 = arith.constant 0 : i32
    %40 = arith.cmpi ne, %39, %c0_i32_25 : i32
    scf.if %40 {
      %c0_26 = arith.constant 0 : index
      %c0_27 = arith.constant 0 : index
      %41 = vector.load %arg8[%c0_26, %c0_27] : memref<64x1xf32, #tpu.memory_space<vmem>>, vector<64x1xf32>
      %42 = tpu.reciprocal %41 {approx = true} : vector<64x1xf32> -> vector<64x1xf32>
      %c0_28 = arith.constant 0 : index
      %c0_29 = arith.constant 0 : index
      %43 = vector.load %arg9[%c0_28, %c0_29] : memref<64x128xf32, #tpu.memory_space<vmem>>, vector<64x128xf32>
      %44 = vector.broadcast %42 : vector<64x1xf32> to vector<64x128xf32>
      %45 = arith.mulf %43, %44 : vector<64x128xf32>
      %c0_30 = arith.constant 0 : index
      %c0_31 = arith.constant 0 : index
      %c0_32 = arith.constant 0 : index
      %46 = vector.load %arg6[%c0_30, %c0_31, %c0_32] : memref<1x64x128xf32, #tpu.memory_space<vmem>>, vector<1x64x128xf32>
      %47 = vector.shape_cast %46 : vector<1x64x128xf32> to vector<64x128xf32>
      %48 = vector.shape_cast %45 : vector<64x128xf32> to vector<1x64x128xf32>
      tpu.vector_store %arg6[%c0_30, %c0_31, %c0_32], %48 {strides = array<i32>} : memref<1x64x128xf32, #tpu.memory_space<vmem>>, vector<1x64x128xf32>,
    } else {
    }
    return
  }
  func.func @transform_0(%arg0: i32, %arg1: i32, %arg2: i32) -> (i32, i32, i32) {
    %c0_i32 = arith.constant 0 : i32
    %c0_i32_0 = arith.constant 0 : i32
    return %arg0, %arg1, %c0_i32 : i32, i32, i32
  }
  func.func @transform_1(%arg0: i32, %arg1: i32, %arg2: i32) -> (i32, i32, i32) {
    %c0_i32 = arith.constant 0 : i32
    %c0_i32_0 = arith.constant 0 : i32
    return %arg0, %arg2, %c0_i32 : i32, i32, i32
  }
  func.func @transform_2(%arg0: i32, %arg1: i32, %arg2: i32) -> (i32, i32, i32) {
    %c0_i32 = arith.constant 0 : i32
    %c0_i32_0 = arith.constant 0 : i32
    return %arg0, %arg2, %c0_i32 : i32, i32, i32
  }
  func.func @transform_3(%arg0: i32, %arg1: i32, %arg2: i32) -> (i32, i32, i32) {
    %c0_i32 = arith.constant 0 : i32
    %c0_i32_0 = arith.constant 0 : i32
    return %arg0, %arg1, %c0_i32 : i32, i32, i32
  }
}

</mosaic_0001>

<llo_original>
// kernel: sdpa.1
$region0: #{sdpa.1}
  #allocation0 [shape = 'u32[]', space=smem, size = 0x4, offset = 0x4, fixed_abs, tag = 'smem constant byte address 0x4 - core index']
  #allocation1 [shape = 'u32[72,128]{1,0:T(1,128)}', space=vmem, size = 0x9000, scoped, tag = 'internal scratch']
  #allocation2 [shape = 'f32[64,1]{1,0:T(8,128)}', space=vmem, size = 0x8000, scoped, tag = 'scratch operand']
  #allocation3 [shape = 'f32[64,1]{1,0:T(8,128)}', space=vmem, size = 0x8000, scoped, tag = 'scratch operand']
  #allocation4 [shape = 'f32[64,128]{1,0:T(8,128)}', space=vmem, size = 0x8000, scoped, tag = 'scratch operand']
  %s0 = inlined_call_operand.hbm [shape: f32[2,128,128], index: 0, kind: input, shape index: {}]
  %s1 = inlined_call_operand.hbm [shape: f32[2,256,128], index: 1, kind: input, shape index: {}]
  %s2 = inlined_call_operand.hbm [shape: f32[2,256,128], index: 2, kind: input, shape index: {}]
  %s3 = inlined_call_operand.hbm [shape: f32[2,128,128], index: 3, kind: output, shape index: {}]
  %s4 = sld [smem:[#allocation0]]
  $region65: #{sdpa.1} parent=0
    _
  %s6 = ssub.s32 1, %s4
  %s7 = scalar_select 0, %s6, %s4
  $region1: #{sdpa.1} parent=0
    #allocation5 [shape = 'u8[65536]{0}', space=vmem, size = 0x10000, scoped, tag = 'input window, operand 0']
    #allocation6 [shape = 's32[2]{0}', space=sflag, size = 0x8, scoped, tag = 'scoped memory for sdpa.1']
    #allocation7 [shape = 's32[2]{0}', space=sflag, size = 0x8, scoped, tag = 'scoped memory for sdpa.1']
    #allocation8 [shape = 'u8[131072]{0}', space=vmem, size = 0x20000, scoped, tag = 'input window, operand 1']
    #allocation9 [shape = 's32[2]{0}', space=sflag, size = 0x8, scoped, tag = 'scoped memory for sdpa.1']
    #allocation10 [shape = 'u8[131072]{0}', space=vmem, size = 0x20000, scoped, tag = 'input window, operand 2']
    #allocation11 [shape = 'u8[65536]{0}', space=vmem, size = 0x10000, scoped, tag = 'output window, operand 0']
    %8 = vsyncpa [#allocation6], 0
    %s9 = scalar_lea.sflag [#allocation6], 1
    %10 = vsyncpa %s9, 0
    %11 = vsyncpa [#allocation9], 0
    %s12 = scalar_lea.sflag [#allocation9], 1
    %13 = vsyncpa %s12, 0
    %14 = vsyncpa [#allocation7], 0
    %s15 = scalar_lea.sflag [#allocation7], 1
    %16 = vsyncpa %s15, 0
    loop: start=0, step=1, limit=10
    $region2: #{sdpa.1} parent=1 // loop_pre_header
      _
    $region3: #{sdpa.1} parent=1 // loop_header
      %s18 = sphi 0, %s22
      %p19 = scmp.ge.s32.totalorder %s18, 10
      %s25 = sphi 0, %s44
      %s26 = sphi 0, %s40
      %s27 = sphi 0, %s36
      %s28 = sphi 0, %s25
      %s29 = sphi 0, %s26
      %s30 = sphi 0, %s27
      %s31 = sphi 0, %s28
      %s32 = sphi 0, %s29
      %s33 = sphi 0, %s30
      %s49 = sphi 0, %s51
      %s52 = sphi 0, %s49
      %s53 = sphi 0, %s52
      %s69 = sphi 0, %s53
      %s77 = sphi 0, %s79
      %s80 = sphi 0, %s77
      %s81 = sphi 0, %s80
      %s97 = sphi 0, %s81
      %s105 = sphi 0, %s107
      %s108 = sphi 0, %s105
      %s109 = sphi 0, %s108
      %s125 = sphi 0, %s109
      %s133 = sphi 0, %s135
      %s136 = sphi 0, %s133
      %s137 = sphi 0, %s136
      %s153 = sphi 0, %s137
    $region4: #{sdpa.1} parent=1 // loop_header_branch
      %21 = sbr.rel (%p19) target = $region8
    $region5: #{sdpa.1} parent=1 // loop_body
      %s23 = ssub.s32 %s18, 1
      %s24 = ssub.s32 %s18, 2
      %s34 = sadd.s32 1, %s27
      %p35 = scmp.ge.s32.totalorder %s34, 2
      %s36 = scalar_select %p35, 0, %s34
      %s37 = sadd.s32 1, %s26
      %s38 = scalar_select %p35, %s37, %s26
      %p39 = scmp.ge.s32.totalorder %s38, 2
      %s40 = scalar_select %p39, 0, %s38
      %s41 = sadd.s32 1, %s25
      %s42 = scalar_select %p39, %s41, %s25
      %p43 = scmp.ge.s32.totalorder %s42, 2
      %s44 = scalar_select %p43, 0, %s42
      %s45 = ssub.s32 %s25, %s44
      %s46 = ssub.s32 %s26, %s40
      %s47 = sor.u32 %s45, %s46
      %p48 = scmp.eq.s32.totalorder %s47, 0
      %s50 = sadd.s32 %s49, 1
      %s51 = scalar_select %p48, %s49, %s50
      %p54 = pneg %p48
      %p55 = scmp.eq.s32.totalorder %s18, 7
      %p56 = por %p54, %p55
      %p57 = scmp.ne.s32.totalorder %s49, %s52
      %p58 = scmp.eq.s32.totalorder %s18, 0
      %p59 = por %p57, %p58
      %p60 = scmp.ne.s32.totalorder %s49, %s52
      %p61 = scmp.eq.s32.totalorder %s23, 7
      %p62 = por %p60, %p61
      %p63 = scmp.ne.s32.totalorder %s52, %s53
      %p64 = scmp.eq.s32.totalorder %s23, 0
      %p65 = por %p63, %p64
      %p66 = scmp.ne.s32.totalorder %s52, %s53
      %p67 = scmp.eq.s32.totalorder %s24, 7
      %p68 = por %p66, %p67
      %p70 = scmp.ne.s32.totalorder %s53, %s69
      %p71 = scmp.eq.s32.totalorder %s24, 0
      %p72 = por %p70, %p71
      %s73 = ssub.s32 %s25, %s44
      %s74 = ssub.s32 %s27, %s36
      %s75 = sor.u32 %s73, %s74
      %p76 = scmp.eq.s32.totalorder %s75, 0
      %s78 = sadd.s32 %s77, 1
      %s79 = scalar_select %p76, %s77, %s78
      %p82 = pneg %p76
      %p83 = scmp.eq.s32.totalorder %s18, 7
      %p84 = por %p82, %p83
      %p85 = scmp.ne.s32.totalorder %s77, %s80
      %p86 = scmp.eq.s32.totalorder %s18, 0
      %p87 = por %p85, %p86
      %p88 = scmp.ne.s32.totalorder %s77, %s80
      %p89 = scmp.eq.s32.totalorder %s23, 7
      %p90 = por %p88, %p89
      %p91 = scmp.ne.s32.totalorder %s80, %s81
      %p92 = scmp.eq.s32.totalorder %s23, 0
      %p93 = por %p91, %p92
      %p94 = scmp.ne.s32.totalorder %s80, %s81
      %p95 = scmp.eq.s32.totalorder %s24, 7
      %p96 = por %p94, %p95
      %p98 = scmp.ne.s32.totalorder %s81, %s97
      %p99 = scmp.eq.s32.totalorder %s24, 0
      %p100 = por %p98, %p99
      %s101 = ssub.s32 %s25, %s44
      %s102 = ssub.s32 %s27, %s36
      %s103 = sor.u32 %s101, %s102
      %p104 = scmp.eq.s32.totalorder %s103, 0
      %s106 = sadd.s32 %s105, 1
      %s107 = scalar_select %p104, %s105, %s106
      %p110 = pneg %p104
      %p111 = scmp.eq.s32.totalorder %s18, 7
      %p112 = por %p110, %p111
      %p113 = scmp.ne.s32.totalorder %s105, %s108
      %p114 = scmp.eq.s32.totalorder %s18, 0
      %p115 = por %p113, %p114
      %p116 = scmp.ne.s32.totalorder %s105, %s108
      %p117 = scmp.eq.s32.totalorder %s23, 7
      %p118 = por %p116, %p117
      %p119 = scmp.ne.s32.totalorder %s108, %s109
      %p120 = scmp.eq.s32.totalorder %s23, 0
      %p121 = por %p119, %p120
      %p122 = scmp.ne.s32.totalorder %s108, %s109
      %p123 = scmp.eq.s32.totalorder %s24, 7
      %p124 = por %p122, %p123
      %p126 = scmp.ne.s32.totalorder %s109, %s125
      %p127 = scmp.eq.s32.totalorder %s24, 0
      %p128 = por %p126, %p127
      %s129 = ssub.s32 %s25, %s44
      %s130 = ssub.s32 %s26, %s40
      %s131 = sor.u32 %s129, %s130
      %p132 = scmp.eq.s32.totalorder %s131, 0
      %s134 = sadd.s32 %s133, 1
      %s135 = scalar_select %p132, %s133, %s134
      %p138 = pneg %p132
      %p139 = scmp.eq.s32.totalorder %s18, 7
      %p140 = por %p138, %p139
      %p141 = scmp.ne.s32.totalorder %s133, %s136
      %p142 = scmp.eq.s32.totalorder %s18, 0
      %p143 = por %p141, %p142
      %p144 = scmp.ne.s32.totalorder %s133, %s136
      %p145 = scmp.eq.s32.totalorder %s23, 7
      %p146 = por %p144, %p145
      %p147 = scmp.ne.s32.totalorder %s136, %s137
      %p148 = scmp.eq.s32.totalorder %s23, 0
      %p149 = por %p147, %p148
      %p150 = scmp.ne.s32.totalorder %s136, %s137
      %p151 = scmp.eq.s32.totalorder %s24, 7
      %p152 = por %p150, %p151
      %p154 = scmp.ne.s32.totalorder %s137, %s153
      %p155 = scmp.eq.s32.totalorder %s24, 0
      %p156 = por %p154, %p155
      %p157 = scmp.le.s32.totalorder 1, %s18
      %p158 = scmp.lt.s32.totalorder %s18, 9
      %p159 = pnand %p157, %p158
      %p160 = pneg %p159
      // Predicated region
      $region9: #{sdpa.1} parent=5 // pred_check
        _
      $region10: #{sdpa.1} parent=5 // pred_check_branch
        %162 = sbr.rel (%p159) target = $region12
      $region11: #{sdpa.1} parent=5 // pred_region
        %s163 = ssub.s32 %s18, 1
      $region12: #{sdpa.1} parent=5 // pred_fallthru
        _
      %p164 = scmp.lt.s32.totalorder %s18, 8
      // Predicated region
      $region13: #{sdpa.1} parent=5 // pred_check
        %p165 = pneg %p164
      $region14: #{sdpa.1} parent=5 // pred_check_branch
        %167 = sbr.rel (%p165) target = $region16
      $region15: #{sdpa.1} parent=5 // pred_region
        // Predicated region
        $region17: #{sdpa.1} parent=15 // pred_check
          %p168 = pneg %p59
        $region18: #{sdpa.1} parent=15 // pred_check_branch
          %170 = sbr.rel (%p168) target = $region20
        $region19: #{sdpa.1} parent=15 // pred_region
          %s171 = sand.u32 %s49, 1
          %s172 = scalar_lea.sflag [#allocation6], %s171
          %s173 = sand.u32 %s49, 1
          %s174 = smul.addr %s173, 64
          %s175 = scalar_lea.vmem [#allocation5], %s174
          %s176 = smul.u32 8, %s26
          %178 = vsyncadd %s172, 0
          %s179 = smul.addr %s25, 16
          %s180 = sadd.s32 %s176, %s179
          %s181 = smul.addr %s180, 8
          %s182 = scalar_lea.hbm %s0, %s181
          %s183 = sshll.u32 %s182, 4
          %s184 = int_to_ptr.hbm [resolvable:$true] %s183
          %s185 = sshll.u32 %s175, 4
          %s186 = int_to_ptr.vmem [resolvable:$true] %s185
          %191 = dma.hbm_to_vmem [thread:$0]  %s184, 1024, %s186, %s172, 128, 128, 8
        $region20: #{sdpa.1} parent=15 // pred_fallthru
          _
        // Predicated region
        $region21: #{sdpa.1} parent=15 // pred_check
          %p192 = pneg %p87
        $region22: #{sdpa.1} parent=15 // pred_check_branch
          %194 = sbr.rel (%p192) target = $region24
        $region23: #{sdpa.1} parent=15 // pred_region
          %s195 = sand.u32 %s18, 1
          %s196 = scalar_lea.sflag [#allocation9], %s195
          %s197 = sand.u32 %s77, 1
          %s198 = smul.addr %s197, 128
          %s199 = scalar_lea.vmem [#allocation8], %s198
          %s200 = smul.u32 16, %s27
          %202 = vsyncadd %s196, 0
          %s203 = smul.addr %s25, 32
          %s204 = sadd.s32 %s200, %s203
          %s205 = smul.addr %s204, 8
          %s206 = scalar_lea.hbm %s1, %s205
          %s207 = sshll.u32 %s206, 4
          %s208 = int_to_ptr.hbm [resolvable:$true] %s207
          %s209 = sshll.u32 %s199, 4
          %s210 = int_to_ptr.vmem [resolvable:$true] %s209
          %215 = dma.hbm_to_vmem [thread:$0]  %s208, 2048, %s210, %s196, 128, 128, 8
        $region24: #{sdpa.1} parent=15 // pred_fallthru
          _
        // Predicated region
        $region25: #{sdpa.1} parent=15 // pred_check
          %p216 = pneg %p115
        $region26: #{sdpa.1} parent=15 // pred_check_branch
          %218 = sbr.rel (%p216) target = $region28
        $region27: #{sdpa.1} parent=15 // pred_region
          %s219 = sand.u32 %s18, 1
          %s220 = scalar_lea.sflag [#allocation9], %s219
          %s221 = sand.u32 %s105, 1
          %s222 = smul.addr %s221, 128
          %s223 = scalar_lea.vmem [#allocation10], %s222
          %s224 = smul.u32 16, %s27
          %226 = vsyncadd %s220, 0
          %s227 = smul.addr %s25, 32
          %s228 = sadd.s32 %s224, %s227
          %s229 = smul.addr %s228, 8
          %s230 = scalar_lea.hbm %s2, %s229
          %s231 = sshll.u32 %s230, 4
          %s232 = int_to_ptr.hbm [resolvable:$true] %s231
          %s233 = sshll.u32 %s223, 4
          %s234 = int_to_ptr.vmem [resolvable:$true] %s233
          %239 = dma.hbm_to_vmem [thread:$0]  %s232, 2048, %s234, %s220, 128, 128, 8
        $region28: #{sdpa.1} parent=15 // pred_fallthru
          _
      $region16: #{sdpa.1} parent=5 // pred_fallthru
        _
      %p240 = scmp.le.s32.totalorder 1, %s18
      %p241 = scmp.lt.s32.totalorder %s18, 9
      %p242 = pnand %p240, %p241
      %p243 = pneg %p242
      // Predicated region
      $region29: #{sdpa.1} parent=5 // pred_check
        _
      $region30: #{sdpa.1} parent=5 // pred_check_branch
        %245 = sbr.rel (%p242) target = $region32
      $region31: #{sdpa.1} parent=5 // pred_region
        %s246 = ssub.s32 %s18, 1
        %s247 = sand.u32 %s52, 1
        %s248 = scalar_lea.sflag [#allocation6], %s247
        %s249 = sand.u32 %s52, 1
        %s250 = smul.addr %s249, 64
        %s251 = scalar_lea.vmem [#allocation5], %s250
        // Predicated region
        $region33: #{sdpa.1} parent=31 // pred_check
          %p252 = pneg %p65
        $region34: #{sdpa.1} parent=31 // pred_check_branch
          %254 = sbr.rel (%p252) target = $region36
        $region35: #{sdpa.1} parent=31 // pred_region
          %256 = dma.done %s248, 1024
        $region36: #{sdpa.1} parent=31 // pred_fallthru
          _
        %s257 = sand.u32 %s23, 1
        %s258 = scalar_lea.sflag [#allocation9], %s257
        %s259 = sand.u32 %s80, 1
        %s260 = smul.addr %s259, 128
        %s261 = scalar_lea.vmem [#allocation8], %s260
        // Predicated region
        $region37: #{sdpa.1} parent=31 // pred_check
          %p262 = pneg %p93
        $region38: #{sdpa.1} parent=31 // pred_check_branch
          %264 = sbr.rel (%p262) target = $region40
        $region39: #{sdpa.1} parent=31 // pred_region
          %266 = dma.done %s258, 2048
        $region40: #{sdpa.1} parent=31 // pred_fallthru
          _
        %s267 = sand.u32 %s23, 1
        %s268 = scalar_lea.sflag [#allocation9], %s267
        %s269 = sand.u32 %s108, 1
        %s270 = smul.addr %s269, 128
        %s271 = scalar_lea.vmem [#allocation10], %s270
        // Predicated region
        $region41: #{sdpa.1} parent=31 // pred_check
          %p272 = pneg %p121
        $region42: #{sdpa.1} parent=31 // pred_check_branch
          %274 = sbr.rel (%p272) target = $region44
        $region43: #{sdpa.1} parent=31 // pred_region
          %276 = dma.done %s268, 2048
        $region44: #{sdpa.1} parent=31 // pred_fallthru
          _
        %s277 = sand.u32 %s52, 1
        %s278 = scalar_lea.sflag [#allocation6], %s277
        %s279 = sand.u32 %s52, 1
        %s280 = smul.addr %s279, 64
        %s281 = scalar_lea.vmem [#allocation5], %s280
        %p282 = pneg %p65
        %p283 = pneg %p62
        %s284 = sand.u32 %s23, 1
        %s285 = scalar_lea.sflag [#allocation9], %s284
        %s286 = sand.u32 %s80, 1
        %s287 = smul.addr %s286, 128
        %s288 = scalar_lea.vmem [#allocation8], %s287
        %p289 = pneg %p93
        %p290 = pneg %p90
        %s291 = sand.u32 %s23, 1
        %s292 = scalar_lea.sflag [#allocation9], %s291
        %s293 = sand.u32 %s108, 1
        %s294 = smul.addr %s293, 128
        %s295 = scalar_lea.vmem [#allocation10], %s294
        %p296 = pneg %p121
        %p297 = pneg %p118
        %p298 = pneg %p149
        %p299 = pneg %p146
        %s300 = sand.u32 %s136, 1
        %s301 = scalar_lea.sflag [#allocation7], %s300
        %s302 = sand.u32 %s136, 1
        %s303 = smul.addr %s302, 64
        %s304 = scalar_lea.vmem [#allocation11], %s303
        %s305 = smul.u32 8, %s29
        %s306 = smul.u32 16, %s30
        %s307 = smul.u32 16, %s30
        %s308 = smul.u32 8, %s29
        %p309 = scmp.eq.s32.totalorder %s30, 0
        // Predicated region
        $region45: #{sdpa.1} parent=31 // pred_check
          %p310 = pneg %p309
        $region46: #{sdpa.1} parent=31 // pred_check_branch
          %312 = sbr.rel (%p310) target = $region48
        $region47: #{sdpa.1} parent=31 // pred_region
          %vm313 = vcmask 7168
          %314 = vst.msk [vmem:[#allocation2] sm:$0xff] %vm313, -inf
          %315 = vst.msk [vmem:[#allocation2 + $0x8] sm:$0xff] %vm313, -inf
          %316 = vst.msk [vmem:[#allocation2 + $0x10] sm:$0xff] %vm313, -inf
          %317 = vst.msk [vmem:[#allocation2 + $0x18] sm:$0xff] %vm313, -inf
          %318 = vst.msk [vmem:[#allocation2 + $0x20] sm:$0xff] %vm313, -inf
          %319 = vst.msk [vmem:[#allocation2 + $0x28] sm:$0xff] %vm313, -inf
          %320 = vst.msk [vmem:[#allocation2 + $0x30] sm:$0xff] %vm313, -inf
          %321 = vst.msk [vmem:[#allocation2 + $0x38] sm:$0xff] %vm313, -inf
          %322 = vst.msk [vmem:[#allocation3] sm:$0xff] %vm313, 0.0
          %323 = vst.msk [vmem:[#allocation3 + $0x8] sm:$0xff] %vm313, 0.0
          %324 = vst.msk [vmem:[#allocation3 + $0x10] sm:$0xff] %vm313, 0.0
          %325 = vst.msk [vmem:[#allocation3 + $0x18] sm:$0xff] %vm313, 0.0
          %326 = vst.msk [vmem:[#allocation3 + $0x20] sm:$0xff] %vm313, 0.0
          %327 = vst.msk [vmem:[#allocation3 + $0x28] sm:$0xff] %vm313, 0.0
          %328 = vst.msk [vmem:[#allocation3 + $0x30] sm:$0xff] %vm313, 0.0
          %329 = vst.msk [vmem:[#allocation3 + $0x38] sm:$0xff] %vm313, 0.0
          %330 = vst [vmem:[#allocation4] sm:$0xff] 0.0
          %331 = vst [vmem:[#allocation4 + $0x8] sm:$0xff] 0.0
          %332 = vst [vmem:[#allocation4 + $0x10] sm:$0xff] 0.0
          %333 = vst [vmem:[#allocation4 + $0x18] sm:$0xff] 0.0
          %334 = vst [vmem:[#allocation4 + $0x20] sm:$0xff] 0.0
          %335 = vst [vmem:[#allocation4 + $0x28] sm:$0xff] 0.0
          %336 = vst [vmem:[#allocation4 + $0x30] sm:$0xff] 0.0
          %337 = vst [vmem:[#allocation4 + $0x38] sm:$0xff] 0.0
        $region48: #{sdpa.1} parent=31 // pred_fallthru
          _
        %v338 = vld [vmem:[%s251] sm:$0xff]
        %v339 = vld [vmem:[%s251 + $0x8] sm:$0xff]
        %v340 = vld [vmem:[%s251 + $0x10] sm:$0xff]
        %v341 = vld [vmem:[%s251 + $0x18] sm:$0xff]
        %v342 = vld [vmem:[%s251 + $0x20] sm:$0xff]
        %v343 = vld [vmem:[%s251 + $0x28] sm:$0xff]
        %v344 = vld [vmem:[%s251 + $0x30] sm:$0xff]
        %v345 = vld [vmem:[%s251 + $0x38] sm:$0xff]
        %v346 = vmul.f32 %v338, 1.6828033
        %v347 = vmul.f32 %v339, 1.6828033
        %v348 = vmul.f32 %v340, 1.6828033
        %v349 = vmul.f32 %v341, 1.6828033
        %v350 = vmul.f32 %v342, 1.6828033
        %v351 = vmul.f32 %v343, 1.6828033
        %v352 = vmul.f32 %v344, 1.6828033
        %v353 = vmul.f32 %v345, 1.6828033
        %v354 = vpack.c.bf16 %v347, %v346
        %v355 = vpack.c.bf16 %v349, %v348
        %v356 = vpack.c.bf16 %v351, %v350
        %v357 = vpack.c.bf16 %v353, %v352
        %v358 = vld [vmem:[%s261] sm:$0xff]
        %v359 = vld [vmem:[%s261 + $0x8] sm:$0xff]
        %v360 = vld [vmem:[%s261 + $0x10] sm:$0xff]
        %v361 = vld [vmem:[%s261 + $0x18] sm:$0xff]
        %v362 = vld [vmem:[%s261 + $0x20] sm:$0xff]
        %v363 = vld [vmem:[%s261 + $0x28] sm:$0xff]
        %v364 = vld [vmem:[%s261 + $0x30] sm:$0xff]
        %v365 = vld [vmem:[%s261 + $0x38] sm:$0xff]
        %v366 = vld [vmem:[%s261 + $0x40] sm:$0xff]
        %v367 = vld [vmem:[%s261 + $0x48] sm:$0xff]
        %v368 = vld [vmem:[%s261 + $0x50] sm:$0xff]
        %v369 = vld [vmem:[%s261 + $0x58] sm:$0xff]
        %v370 = vld [vmem:[%s261 + $0x60] sm:$0xff]
        %v371 = vld [vmem:[%s261 + $0x68] sm:$0xff]
        %v372 = vld [vmem:[%s261 + $0x70] sm:$0xff]
        %v373 = vld [vmem:[%s261 + $0x78] sm:$0xff]
        %v374 = vpack.c.bf16 %v359, %v358
        %v375 = vpack.c.bf16 %v361, %v360
        %v376 = vpack.c.bf16 %v363, %v362
        %v377 = vpack.c.bf16 %v365, %v364
        %v378 = vpack.c.bf16 %v367, %v366
        %v379 = vpack.c.bf16 %v369, %v368
        %v380 = vpack.c.bf16 %v371, %v370
        %v381 = vpack.c.bf16 %v373, %v372
        %v382 = vld [vmem:[%s271] sm:$0xff]
        %v383 = vld [vmem:[%s271 + $0x8] sm:$0xff]
        %v384 = vld [vmem:[%s271 + $0x10] sm:$0xff]
        %v385 = vld [vmem:[%s271 + $0x18] sm:$0xff]
        %v386 = vld [vmem:[%s271 + $0x20] sm:$0xff]
        %v387 = vld [vmem:[%s271 + $0x28] sm:$0xff]
        %v388 = vld [vmem:[%s271 + $0x30] sm:$0xff]
        %v389 = vld [vmem:[%s271 + $0x38] sm:$0xff]
        %v390 = vld [vmem:[%s271 + $0x40] sm:$0xff]
        %v391 = vld [vmem:[%s271 + $0x48] sm:$0xff]
        %v392 = vld [vmem:[%s271 + $0x50] sm:$0xff]
        %v393 = vld [vmem:[%s271 + $0x58] sm:$0xff]
        %v394 = vld [vmem:[%s271 + $0x60] sm:$0xff]
        %v395 = vld [vmem:[%s271 + $0x68] sm:$0xff]
        %v396 = vld [vmem:[%s271 + $0x70] sm:$0xff]
        %v397 = vld [vmem:[%s271 + $0x78] sm:$0xff]
        %v398 = vpack.c.bf16 %v383, %v382
        %v399 = vpack.c.bf16 %v385, %v384
        %v400 = vpack.c.bf16 %v387, %v386
        %v401 = vpack.c.bf16 %v389, %v388
        %v402 = vpack.c.bf16 %v391, %v390
        %v403 = vpack.c.bf16 %v393, %v392
        %v404 = vpack.c.bf16 %v395, %v394
        %v405 = vpack.c.bf16 %v397, %v396
        %406 = vmatpush.bf16.xpose.msra.mxu0 %v381
        %407 = vmatpush.bf16.xpose.msra.mxu0 %v380
        %408 = vmatpush.bf16.xpose.msra.mxu0 %v379
        %409 = vmatpush.bf16.xpose.msra.mxu0 %v378
        %410 = vmatpush.bf16.xpose.msra.mxu0 %v377
        %411 = vmatpush.bf16.xpose.msra.mxu0 %v376
        %412 = vmatpush.bf16.xpose.msra.mxu0 %v375
        %413 = vmatpush.bf16.xpose.msra.mxu0 %v374
        %414 = vmatmul.bf16.gmra.mxu0 %v354
        %v415 = vpop.f32.mrf.mxu0
        %v416 = vadd.f32 0.0, %v415
        %v417 = vpop.f32.mrf.mxu0
        %v418 = vadd.f32 0.0, %v417
        %419 = vmatmul.bf16.gmra.mxu0 %v355
        %v420 = vpop.f32.mrf.mxu0
        %v421 = vadd.f32 0.0, %v420
        %v422 = vpop.f32.mrf.mxu0
        %v423 = vadd.f32 0.0, %v422
        %424 = vmatmul.bf16.gmra.mxu0 %v356
        %v425 = vpop.f32.mrf.mxu0
        %v426 = vadd.f32 0.0, %v425
        %v427 = vpop.f32.mrf.mxu0
        %v428 = vadd.f32 0.0, %v427
        %429 = vmatmul.bf16.gmra.mxu0 %v357
        %v430 = vpop.f32.mrf.mxu0
        %v431 = vadd.f32 0.0, %v430
        %v432 = vpop.f32.mrf.mxu0
        %v433 = vadd.f32 0.0, %v432
        %434 = vdwg.mxu0
        %v435 = vld [vmem:[#allocation2] sm:$0xff]
        %v436 = vld [vmem:[#allocation2 + $0x8] sm:$0xff]
        %v437 = vld [vmem:[#allocation2 + $0x10] sm:$0xff]
        %v438 = vld [vmem:[#allocation2 + $0x18] sm:$0xff]
        %v439 = vld [vmem:[#allocation2 + $0x20] sm:$0xff]
        %v440 = vld [vmem:[#allocation2 + $0x28] sm:$0xff]
        %v441 = vld [vmem:[#allocation2 + $0x30] sm:$0xff]
        %v442 = vld [vmem:[#allocation2 + $0x38] sm:$0xff]
        %443 = vmax.xlane.f32.xlu0 %v416
        %v444 = vpop.xlane.xlu0 %443
        %445 = vmax.xlane.f32.xlu0 %v418
        %v446 = vpop.xlane.xlu0 %445
        %447 = vmax.xlane.f32.xlu0 %v421
        %v448 = vpop.xlane.xlu0 %447
        %449 = vmax.xlane.f32.xlu0 %v423
        %v450 = vpop.xlane.xlu0 %449
        %451 = vmax.xlane.f32.xlu0 %v426
        %v452 = vpop.xlane.xlu0 %451
        %453 = vmax.xlane.f32.xlu0 %v428
        %v454 = vpop.xlane.xlu0 %453
        %455 = vmax.xlane.f32.xlu0 %v431
        %v456 = vpop.xlane.xlu0 %455
        %457 = vmax.xlane.f32.xlu0 %v433
        %v458 = vpop.xlane.xlu0 %457
        %v459 = vmax.f32 %v435, %v444
        %v460 = vmax.f32 %v436, %v446
        %v461 = vmax.f32 %v437, %v448
        %v462 = vmax.f32 %v438, %v450
        %v463 = vmax.f32 %v439, %v452
        %v464 = vmax.f32 %v440, %v454
        %v465 = vmax.f32 %v441, %v456
        %v466 = vmax.f32 %v442, %v458
        %v467 = vsub.f32 %v435, %v459
        %v468 = vsub.f32 %v436, %v460
        %v469 = vsub.f32 %v437, %v461
        %v470 = vsub.f32 %v438, %v462
        %v471 = vsub.f32 %v439, %v463
        %v472 = vsub.f32 %v440, %v464
        %v473 = vsub.f32 %v441, %v465
        %v474 = vsub.f32 %v442, %v466
        %v475 = vmul.f32 %v467, 1.442695
        %v476 = vpow.pop %v475
        %v477 = vmul.f32 %v468, 1.442695
        %v478 = vpow.pop %v477
        %v479 = vmul.f32 %v469, 1.442695
        %v480 = vpow.pop %v479
        %v481 = vmul.f32 %v470, 1.442695
        %v482 = vpow.pop %v481
        %v483 = vmul.f32 %v471, 1.442695
        %v484 = vpow.pop %v483
        %v485 = vmul.f32 %v472, 1.442695
        %v486 = vpow.pop %v485
        %v487 = vmul.f32 %v473, 1.442695
        %v488 = vpow.pop %v487
        %v489 = vmul.f32 %v474, 1.442695
        %v490 = vpow.pop %v489
        %492 = vset.pattern.permute.xlu0 0
        %493 = vperm.xlu0 %492, %v459
        %v494 = vpop.permute.xlu0 %493
        %497 = vset.pattern.permute.xlu0 0
        %498 = vperm.xlu0 %497, %v460
        %v499 = vpop.permute.xlu0 %498
        %502 = vset.pattern.permute.xlu0 0
        %503 = vperm.xlu0 %502, %v461
        %v504 = vpop.permute.xlu0 %503
        %507 = vset.pattern.permute.xlu0 0
        %508 = vperm.xlu0 %507, %v462
        %v509 = vpop.permute.xlu0 %508
        %512 = vset.pattern.permute.xlu0 0
        %513 = vperm.xlu0 %512, %v463
        %v514 = vpop.permute.xlu0 %513
        %517 = vset.pattern.permute.xlu0 0
        %518 = vperm.xlu0 %517, %v464
        %v519 = vpop.permute.xlu0 %518
        %522 = vset.pattern.permute.xlu0 0
        %523 = vperm.xlu0 %522, %v465
        %v524 = vpop.permute.xlu0 %523
        %527 = vset.pattern.permute.xlu0 0
        %528 = vperm.xlu0 %527, %v466
        %v529 = vpop.permute.xlu0 %528
        %v531 = vsub.f32 %v416, %v494
        %v532 = vsub.f32 %v418, %v499
        %v533 = vsub.f32 %v421, %v504
        %v534 = vsub.f32 %v423, %v509
        %v535 = vsub.f32 %v426, %v514
        %v536 = vsub.f32 %v428, %v519
        %v537 = vsub.f32 %v431, %v524
        %v538 = vsub.f32 %v433, %v529
        %v539 = vmul.f32 %v531, 1.442695
        %v540 = vpow.pop %v539
        %v541 = vmul.f32 %v532, 1.442695
        %v542 = vpow.pop %v541
        %v543 = vmul.f32 %v533, 1.442695
        %v544 = vpow.pop %v543
        %v545 = vmul.f32 %v534, 1.442695
        %v546 = vpow.pop %v545
        %v547 = vmul.f32 %v535, 1.442695
        %v548 = vpow.pop %v547
        %v549 = vmul.f32 %v536, 1.442695
        %v550 = vpow.pop %v549
        %v551 = vmul.f32 %v537, 1.442695
        %v552 = vpow.pop %v551
        %v553 = vmul.f32 %v538, 1.442695
        %v554 = vpow.pop %v553
        %v555 = vld [vmem:[#allocation3] sm:$0xff]
        %v556 = vld [vmem:[#allocation3 + $0x8] sm:$0xff]
        %v557 = vld [vmem:[#allocation3 + $0x10] sm:$0xff]
        %v558 = vld [vmem:[#allocation3 + $0x18] sm:$0xff]
        %v559 = vld [vmem:[#allocation3 + $0x20] sm:$0xff]
        %v560 = vld [vmem:[#allocation3 + $0x28] sm:$0xff]
        %v561 = vld [vmem:[#allocation3 + $0x30] sm:$0xff]
        %v562 = vld [vmem:[#allocation3 + $0x38] sm:$0xff]
        %v563 = vmul.f32 %v476, %v555
        %v564 = vmul.f32 %v478, %v556
        %v565 = vmul.f32 %v480, %v557
        %v566 = vmul.f32 %v482, %v558
        %v567 = vmul.f32 %v484, %v559
        %v568 = vmul.f32 %v486, %v560
        %v569 = vmul.f32 %v488, %v561
        %v570 = vmul.f32 %v490, %v562
        %571 = vadd.xlane.f32.xlu0 %v540
        %v572 = vpop.xlane.xlu0 %571
        %573 = vadd.xlane.f32.xlu0 %v542
        %v574 = vpop.xlane.xlu0 %573
        %575 = vadd.xlane.f32.xlu0 %v544
        %v576 = vpop.xlane.xlu0 %575
        %577 = vadd.xlane.f32.xlu0 %v546
        %v578 = vpop.xlane.xlu0 %577
        %579 = vadd.xlane.f32.xlu0 %v548
        %v580 = vpop.xlane.xlu0 %579
        %581 = vadd.xlane.f32.xlu0 %v550
        %v582 = vpop.xlane.xlu0 %581
        %583 = vadd.xlane.f32.xlu0 %v552
        %v584 = vpop.xlane.xlu0 %583
        %585 = vadd.xlane.f32.xlu0 %v554
        %v586 = vpop.xlane.xlu0 %585
        %v587 = vadd.f32 %v563, %v572
        %v588 = vadd.f32 %v564, %v574
        %v589 = vadd.f32 %v565, %v576
        %v590 = vadd.f32 %v566, %v578
        %v591 = vadd.f32 %v567, %v580
        %v592 = vadd.f32 %v568, %v582
        %v593 = vadd.f32 %v569, %v584
        %v594 = vadd.f32 %v570, %v586
        %vm595 = vcmask 7168
        %596 = vst.msk [vmem:[#allocation3] sm:$0xff] %vm595, %v587
        %597 = vst.msk [vmem:[#allocation3 + $0x8] sm:$0xff] %vm595, %v588
        %598 = vst.msk [vmem:[#allocation3 + $0x10] sm:$0xff] %vm595, %v589
        %599 = vst.msk [vmem:[#allocation3 + $0x18] sm:$0xff] %vm595, %v590
        %600 = vst.msk [vmem:[#allocation3 + $0x20] sm:$0xff] %vm595, %v591
        %601 = vst.msk [vmem:[#allocation3 + $0x28] sm:$0xff] %vm595, %v592
        %602 = vst.msk [vmem:[#allocation3 + $0x30] sm:$0xff] %vm595, %v593
        %603 = vst.msk [vmem:[#allocation3 + $0x38] sm:$0xff] %vm595, %v594
        %v604 = vld [vmem:[#allocation4] sm:$0xff]
        %v605 = vld [vmem:[#allocation4 + $0x8] sm:$0xff]
        %v606 = vld [vmem:[#allocation4 + $0x10] sm:$0xff]
        %v607 = vld [vmem:[#allocation4 + $0x18] sm:$0xff]
        %v608 = vld [vmem:[#allocation4 + $0x20] sm:$0xff]
        %v609 = vld [vmem:[#allocation4 + $0x28] sm:$0xff]
        %v610 = vld [vmem:[#allocation4 + $0x30] sm:$0xff]
        %v611 = vld [vmem:[#allocation4 + $0x38] sm:$0xff]
        %613 = vset.pattern.permute.xlu0 0
        %614 = vperm.xlu0 %613, %v476
        %v615 = vpop.permute.xlu0 %614
        %618 = vset.pattern.permute.xlu0 0
        %619 = vperm.xlu0 %618, %v478
        %v620 = vpop.permute.xlu0 %619
        %623 = vset.pattern.permute.xlu0 0
        %624 = vperm.xlu0 %623, %v480
        %v625 = vpop.permute.xlu0 %624
        %628 = vset.pattern.permute.xlu0 0
        %629 = vperm.xlu0 %628, %v482
        %v630 = vpop.permute.xlu0 %629
        %633 = vset.pattern.permute.xlu0 0
        %634 = vperm.xlu0 %633, %v484
        %v635 = vpop.permute.xlu0 %634
        %638 = vset.pattern.permute.xlu0 0
        %639 = vperm.xlu0 %638, %v486
        %v640 = vpop.permute.xlu0 %639
        %643 = vset.pattern.permute.xlu0 0
        %644 = vperm.xlu0 %643, %v488
        %v645 = vpop.permute.xlu0 %644
        %648 = vset.pattern.permute.xlu0 0
        %649 = vperm.xlu0 %648, %v490
        %v650 = vpop.permute.xlu0 %649
        %v652 = vmul.f32 %v615, %v604
        %v653 = vmul.f32 %v620, %v605
        %v654 = vmul.f32 %v625, %v606
        %v655 = vmul.f32 %v630, %v607
        %v656 = vmul.f32 %v635, %v608
        %v657 = vmul.f32 %v640, %v609
        %v658 = vmul.f32 %v645, %v610
        %v659 = vmul.f32 %v650, %v611
        %v660 = vpack.c.bf16 %v542, %v540
        %v661 = vpack.c.bf16 %v546, %v544
        %v662 = vpack.c.bf16 %v550, %v548
        %v663 = vpack.c.bf16 %v554, %v552
        %664 = vmatpush.bf16.msra.mxu0 %v405
        %665 = vmatpush.bf16.msra.mxu0 %v404
        %666 = vmatpush.bf16.msra.mxu0 %v403
        %667 = vmatpush.bf16.msra.mxu0 %v402
        %668 = vmatpush.bf16.msra.mxu0 %v401
        %669 = vmatpush.bf16.msra.mxu0 %v400
        %670 = vmatpush.bf16.msra.mxu0 %v399
        %671 = vmatpush.bf16.msra.mxu0 %v398
        %672 = vmatmul.bf16.gmra.mxu0 %v660
        %v673 = vpop.f32.mrf.mxu0
        %v674 = vadd.f32 0.0, %v673
        %v675 = vpop.f32.mrf.mxu0
        %v676 = vadd.f32 0.0, %v675
        %677 = vmatmul.bf16.gmra.mxu0 %v661
        %v678 = vpop.f32.mrf.mxu0
        %v679 = vadd.f32 0.0, %v678
        %v680 = vpop.f32.mrf.mxu0
        %v681 = vadd.f32 0.0, %v680
        %682 = vmatmul.bf16.gmra.mxu0 %v662
        %v683 = vpop.f32.mrf.mxu0
        %v684 = vadd.f32 0.0, %v683
        %v685 = vpop.f32.mrf.mxu0
        %v686 = vadd.f32 0.0, %v685
        %687 = vmatmul.bf16.gmra.mxu0 %v663
        %v688 = vpop.f32.mrf.mxu0
        %v689 = vadd.f32 0.0, %v688
        %v690 = vpop.f32.mrf.mxu0
        %v691 = vadd.f32 0.0, %v690
        %692 = vdwg.mxu0
        %v693 = vadd.f32 %v652, %v674
        %v694 = vadd.f32 %v653, %v676
        %v695 = vadd.f32 %v654, %v679
        %v696 = vadd.f32 %v655, %v681
        %v697 = vadd.f32 %v656, %v684
        %v698 = vadd.f32 %v657, %v686
        %v699 = vadd.f32 %v658, %v689
        %v700 = vadd.f32 %v659, %v691
        %701 = vst [vmem:[#allocation4] sm:$0xff] %v693
        %702 = vst [vmem:[#allocation4 + $0x8] sm:$0xff] %v694
        %703 = vst [vmem:[#allocation4 + $0x10] sm:$0xff] %v695
        %704 = vst [vmem:[#allocation4 + $0x18] sm:$0xff] %v696
        %705 = vst [vmem:[#allocation4 + $0x20] sm:$0xff] %v697
        %706 = vst [vmem:[#allocation4 + $0x28] sm:$0xff] %v698
        %707 = vst [vmem:[#allocation4 + $0x30] sm:$0xff] %v699
        %708 = vst [vmem:[#allocation4 + $0x38] sm:$0xff] %v700
        %709 = vst.msk [vmem:[#allocation2] sm:$0xff] %vm595, %v459
        %710 = vst.msk [vmem:[#allocation2 + $0x8] sm:$0xff] %vm595, %v460
        %711 = vst.msk [vmem:[#allocation2 + $0x10] sm:$0xff] %vm595, %v461
        %712 = vst.msk [vmem:[#allocation2 + $0x18] sm:$0xff] %vm595, %v462
        %713 = vst.msk [vmem:[#allocation2 + $0x20] sm:$0xff] %vm595, %v463
        %714 = vst.msk [vmem:[#allocation2 + $0x28] sm:$0xff] %vm595, %v464
        %715 = vst.msk [vmem:[#allocation2 + $0x30] sm:$0xff] %vm595, %v465
        %716 = vst.msk [vmem:[#allocation2 + $0x38] sm:$0xff] %vm595, %v466
        %p717 = scmp.eq.s32.totalorder %s30, 1
        // Predicated region
        $region49: #{sdpa.1} parent=31 // pred_check
          %p718 = pneg %p717
        $region50: #{sdpa.1} parent=31 // pred_check_branch
          %720 = sbr.rel (%p718) target = $region52
        $region51: #{sdpa.1} parent=31 // pred_region
          %v721 = vld [vmem:[#allocation3] sm:$0xff]
          %v722 = vld [vmem:[#allocation3 + $0x8] sm:$0xff]
          %v723 = vld [vmem:[#allocation3 + $0x10] sm:$0xff]
          %v724 = vld [vmem:[#allocation3 + $0x18] sm:$0xff]
          %v725 = vld [vmem:[#allocation3 + $0x20] sm:$0xff]
          %v726 = vld [vmem:[#allocation3 + $0x28] sm:$0xff]
          %v727 = vld [vmem:[#allocation3 + $0x30] sm:$0xff]
          %v728 = vld [vmem:[#allocation3 + $0x38] sm:$0xff]
          %v729 = vrcp.pop %v721
          %v730 = vrcp.pop %v722
          %v731 = vrcp.pop %v723
          %v732 = vrcp.pop %v724
          %v733 = vrcp.pop %v725
          %v734 = vrcp.pop %v726
          %v735 = vrcp.pop %v727
          %v736 = vrcp.pop %v728
          %v737 = vld [vmem:[#allocation4] sm:$0xff]
          %v738 = vld [vmem:[#allocation4 + $0x8] sm:$0xff]
          %v739 = vld [vmem:[#allocation4 + $0x10] sm:$0xff]
          %v740 = vld [vmem:[#allocation4 + $0x18] sm:$0xff]
          %v741 = vld [vmem:[#allocation4 + $0x20] sm:$0xff]
          %v742 = vld [vmem:[#allocation4 + $0x28] sm:$0xff]
          %v743 = vld [vmem:[#allocation4 + $0x30] sm:$0xff]
          %v744 = vld [vmem:[#allocation4 + $0x38] sm:$0xff]
          %746 = vset.pattern.permute.xlu0 0
          %747 = vperm.xlu0 %746, %v729
          %v748 = vpop.permute.xlu0 %747
          %751 = vset.pattern.permute.xlu0 0
          %752 = vperm.xlu0 %751, %v730
          %v753 = vpop.permute.xlu0 %752
          %756 = vset.pattern.permute.xlu0 0
          %757 = vperm.xlu0 %756, %v731
          %v758 = vpop.permute.xlu0 %757
          %761 = vset.pattern.permute.xlu0 0
          %762 = vperm.xlu0 %761, %v732
          %v763 = vpop.permute.xlu0 %762
          %766 = vset.pattern.permute.xlu0 0
          %767 = vperm.xlu0 %766, %v733
          %v768 = vpop.permute.xlu0 %767
          %771 = vset.pattern.permute.xlu0 0
          %772 = vperm.xlu0 %771, %v734
          %v773 = vpop.permute.xlu0 %772
          %776 = vset.pattern.permute.xlu0 0
          %777 = vperm.xlu0 %776, %v735
          %v778 = vpop.permute.xlu0 %777
          %781 = vset.pattern.permute.xlu0 0
          %782 = vperm.xlu0 %781, %v736
          %v783 = vpop.permute.xlu0 %782
          %v785 = vmul.f32 %v737, %v748
          %v786 = vmul.f32 %v738, %v753
          %v787 = vmul.f32 %v739, %v758
          %v788 = vmul.f32 %v740, %v763
          %v789 = vmul.f32 %v741, %v768
          %v790 = vmul.f32 %v742, %v773
          %v791 = vmul.f32 %v743, %v778
          %v792 = vmul.f32 %v744, %v783
          %793 = vst [vmem:[%s304] sm:$0xff] %v785
          %794 = vst [vmem:[%s304 + $0x8] sm:$0xff] %v786
          %795 = vst [vmem:[%s304 + $0x10] sm:$0xff] %v787
          %796 = vst [vmem:[%s304 + $0x18] sm:$0xff] %v788
          %797 = vst [vmem:[%s304 + $0x20] sm:$0xff] %v789
          %798 = vst [vmem:[%s304 + $0x28] sm:$0xff] %v790
          %799 = vst [vmem:[%s304 + $0x30] sm:$0xff] %v791
          %800 = vst [vmem:[%s304 + $0x38] sm:$0xff] %v792
        $region52: #{sdpa.1} parent=31 // pred_fallthru
          _
        %s801 = sand.u32 %s136, 1
        %s802 = scalar_lea.sflag [#allocation7], %s801
        %s803 = sand.u32 %s136, 1
        %s804 = smul.addr %s803, 64
        %s805 = scalar_lea.vmem [#allocation11], %s804
        // Predicated region
        $region53: #{sdpa.1} parent=31 // pred_check
          %p806 = pneg %p146
        $region54: #{sdpa.1} parent=31 // pred_check_branch
          %808 = sbr.rel (%p806) target = $region56
        $region55: #{sdpa.1} parent=31 // pred_region
          %s809 = smul.u32 8, %s29
          %811 = vsyncadd %s802, 0
          %s812 = smul.addr %s28, 16
          %s813 = sadd.s32 %s809, %s812
          %s814 = smul.addr %s813, 8
          %s815 = scalar_lea.hbm %s3, %s814
          %s816 = sshll.u32 %s805, 4
          %s817 = int_to_ptr.vmem [resolvable:$true] %s816
          %s818 = sshll.u32 %s815, 4
          %s819 = int_to_ptr.hbm [resolvable:$true] %s818
          %824 = dma.vmem_to_hbm [thread:$0]  %s817, 1024, %s819, %s802, 128, 128, 8
        $region56: #{sdpa.1} parent=31 // pred_fallthru
          _
      $region32: #{sdpa.1} parent=5 // pred_fallthru
        _
      %p825 = scmp.le.s32.totalorder 2, %s18
      // Predicated region
      $region57: #{sdpa.1} parent=5 // pred_check
        %p826 = pneg %p825
      $region58: #{sdpa.1} parent=5 // pred_check_branch
        %828 = sbr.rel (%p826) target = $region60
      $region59: #{sdpa.1} parent=5 // pred_region
        %s829 = ssub.s32 %s18, 2
        // Predicated region
        $region61: #{sdpa.1} parent=59 // pred_check
          %p830 = pneg %p152
        $region62: #{sdpa.1} parent=59 // pred_check_branch
          %832 = sbr.rel (%p830) target = $region64
        $region63: #{sdpa.1} parent=59 // pred_region
          %s833 = sand.u32 %s137, 1
          %s834 = scalar_lea.sflag [#allocation7], %s833
          %s835 = sand.u32 %s137, 1
          %s836 = smul.addr %s835, 64
          %s837 = scalar_lea.vmem [#allocation11], %s836
          %839 = dma.done %s834, 1024
        $region64: #{sdpa.1} parent=59 // pred_fallthru
          _
      $region60: #{sdpa.1} parent=5 // pred_fallthru
        _
    $region6: #{sdpa.1} parent=1 // loop_footer
      %s22 = sadd.s32 1, %s18
    $region7: #{sdpa.1} parent=1 // loop_footer_branch
      %17 = sbr.rel target = $region3
    $region8: #{sdpa.1} parent=1 // loop_exit
      _
    %840 = vsyncpa [#allocation6], 1
    %s841 = scalar_lea.sflag [#allocation6], 1
    %842 = vsyncpa %s841, 1
    %843 = vsyncpa [#allocation9], 1
    %s844 = scalar_lea.sflag [#allocation9], 1
    %845 = vsyncpa %s844, 1
    %846 = vsyncpa [#allocation7], 1
    %s847 = scalar_lea.sflag [#allocation7], 1
    %848 = vsyncpa %s847, 1

</llo_original>
